<compile_context>
chip_gen: v7x
topology: tpu7x:2x2x1
jax: 0.10.0
libtpu: 0.0.40
codegen_flags: <defaults>
</compile_context>

<pallas_src>
import math
import jax
import jax.numpy as jnp
from jax.experimental import pallas as pl
from jax.experimental.pallas import tpu as pltpu

D_IN = 13        # real input features
PAD = 128        # lane-aligned padded width (13 / 100 / 1 -> 128)
N_LAYERS = 4


def mlp_kernel(x_ref, w_ref, b_ref, o_ref, xpad_ref):
    # Zero-extend the 13 real feature lanes into a lane-aligned VMEM scratch.
    # Zero padding is mathematically exact through every layer.
    xpad_ref[...] = jnp.zeros_like(xpad_ref)
    xpad_ref[:, :D_IN] = x_ref[...]

    h = xpad_ref[...].astype(jnp.bfloat16)      # bf16 feed to the MXU

    # Three hidden layers: bf16 matmul, f32 accumulate, f32 bias + ReLU.
    for l in range(N_LAYERS - 1):
        a = jnp.dot(h, w_ref[l], preferred_element_type=jnp.float32) + b_ref[l]
        a = jnp.maximum(a, 0.0)                 # f32 VPU (v5e has no bf16 ALU)
        h = a.astype(jnp.bfloat16)              # downcast only right before dot

    # Final layer written into the full lane-dense (TB,128) block (unmasked
    # store); only column 0 is meaningful and is sliced outside the kernel.
    y = jnp.dot(h, w_ref[N_LAYERS - 1], preferred_element_type=jnp.float32)
    o_ref[...] = (y + b_ref[N_LAYERS - 1]).astype(o_ref.dtype)


def prepare_params(params):
    """One-time padding / packing / bf16-casting of the 4 Linear layers.

    Returns:
      w_packed: (4, 128, 128) bfloat16  zero-padded (in, out) weights
      b_packed: (4, 1, 128)   float32   zero-padded biases
    """
    w1, b1, w2, b2, w3, b3, w4, b4 = params

    def pad_w(w):
        return jnp.pad(w, ((0, PAD - w.shape[0]), (0, PAD - w.shape[1])))

    def pad_b(b):
        return jnp.pad(b, ((0, 0), (0, PAD - b.shape[1])))

    w_packed = jnp.stack(
        [pad_w(w1), pad_w(w2), pad_w(w3), pad_w(w4)]).astype(jnp.bfloat16)
    b_packed = jnp.stack(
        [pad_b(b1), pad_b(b2), pad_b(b3), pad_b(b4)]).astype(jnp.float32)
    return w_packed, b_packed


def _forward_impl(x, w_packed, b_packed):
    """x: (B, 13) float32. Returns (B, 1) float32."""
    B = x.shape[0]
    # Batch tile: sublane-aligned for tiny batches, 128-row tiles otherwise.
    TB = 128 if B >= 128 else max(8, ((B + 7) // 8) * 8)
    B_pad = ((B + TB - 1) // TB) * TB
    x = x.astype(jnp.float32)
    if B_pad != B:
        x = jnp.pad(x, ((0, B_pad - B), (0, 0)))

    out_padded = pl.pallas_call(
        mlp_kernel,
        out_shape=jax.ShapeDtypeStruct((B_pad, PAD), jnp.float32),
        grid=(B_pad // TB,),
        in_specs=[
            pl.BlockSpec((TB, D_IN), lambda i: (i, 0)),
            # Constant index maps: weights/biases stay VMEM-resident across
            # batch tiles (no re-DMA per grid step).
            pl.BlockSpec((N_LAYERS, PAD, PAD), lambda i: (0, 0, 0)),
            pl.BlockSpec((N_LAYERS, 1, PAD), lambda i: (0, 0, 0)),
        ],
        out_specs=pl.BlockSpec((TB, PAD), lambda i: (i, 0)),
        scratch_shapes=[pltpu.VMEM((TB, PAD), jnp.float32)],
        compiler_params=pltpu.CompilerParams(
            dimension_semantics=("parallel",)),
    )(x, w_packed, b_packed)

    # True output is column 0 of the lane-dense padded block.
    return out_padded[:B, :1]


net_forward = jax.jit(_forward_impl)


def init_linear(key, fan_in, fan_out):
    # Mirror PyTorch nn.Linear default init: U(-1/sqrt(fan_in), 1/sqrt(fan_in)).
    kw, kb = jax.random.split(key)
    bound = 1.0 / math.sqrt(fan_in)
    # Stored as (in, out) so the kernel computes x @ W (PyTorch stores (out, in)).
    w = jax.random.uniform(kw, (fan_in, fan_out), jnp.float32, -bound, bound)
    b = jax.random.uniform(kb, (1, fan_out), jnp.float32, -bound, bound)
    return w, b


def reference_forward(x, params):
    """Reference using the same bf16-weight / f32-accumulate recipe as the kernel."""
    w1, b1, w2, b2, w3, b3, w4, b4 = params

    def lin(h, w, b):
        return jnp.dot(h.astype(jnp.bfloat16), w.astype(jnp.bfloat16),
                       preferred_element_type=jnp.float32) + b

    h = jnp.maximum(lin(x, w1, b1), 0.0)
    h = jnp.maximum(lin(h, w2, b2), 0.0)
    h = jnp.maximum(lin(h, w3, b3), 0.0)
    return lin(h, w4, b4)


if __name__ == "__main__":
    key = jax.random.PRNGKey(0)
    kx, k1, k2, k3, k4 = jax.random.split(key, 5)

    # B=128: amortizes dispatch over one full lane/sublane-aligned batch tile.
    B, H, D_OUT = 128, 100, 1
    x = jax.random.normal(kx, (B, D_IN), jnp.float32)

    w1, b1 = init_linear(k1, D_IN, H)
    w2, b2 = init_linear(k2, H, H)
    w3, b3 = init_linear(k3, H, H)
    w4, b4 = init_linear(k4, H, D_OUT)
    params = (w1, b1, w2, b2, w3, b3, w4, b4)

    # One-time (outside the per-call path): pad + pack + bf16-cast params.
    w_packed, b_packed = jax.block_until_ready(prepare_params(params))

    out = net_forward(x, w_packed, b_packed)
    out = jax.block_until_ready(out)

    ref = reference_forward(x, params)
    assert out.shape == (B, D_OUT)
    assert jnp.allclose(out, ref, atol=1e-2, rtol=1e-2), \
        float(jnp.max(jnp.abs(out - ref)))

    print("KERNEL_OK")
</pallas_src>

<mosaic_0001>
module attributes {stable_mosaic.version = 11 : i64} {
  func.func @mlp_kernel(%arg0: i32, %arg1: memref<128x13xf32, #tpu.memory_space<vmem>>, %arg2: memref<4x128x128xbf16, #tpu.memory_space<vmem>>, %arg3: memref<4x1x128xf32, #tpu.memory_space<vmem>>, %arg4: memref<128x128xf32, #tpu.memory_space<vmem>>, %arg5: memref<128x128xf32, #tpu.memory_space<vmem>>) attributes {dimension_semantics = [#tpu.dimension_semantics<parallel>], iteration_bounds = array<i64: 1>, scalar_prefetch = 0 : i64, scratch_operands = 1 : i64, tpu.core_type = #tpu.core_type<tc>, window_params = [{transform_indices = @transform_0, window_bounds = array<i64: 128, 13>}, {pipeline_mode = #tpu.pipeline_mode<synchronous>, transform_indices = @transform_1, window_bounds = array<i64: 4, 128, 128>}, {pipeline_mode = #tpu.pipeline_mode<synchronous>, transform_indices = @transform_2, window_bounds = array<i64: 4, 1, 128>}, {transform_indices = @transform_3, window_bounds = array<i64: 128, 128>}]} {
    %cst = arith.constant 0.000000e+00 : f32
    %0 = vector.broadcast %cst : f32 to vector<128x128xf32>
    %c0 = arith.constant 0 : index
    %c0_0 = arith.constant 0 : index
    %1 = vector.load %arg5[%c0, %c0_0] : memref<128x128xf32, #tpu.memory_space<vmem>>, vector<128x128xf32>
    tpu.vector_store %arg5[%c0, %c0_0], %0 {strides = array<i32>} : memref<128x128xf32, #tpu.memory_space<vmem>>, vector<128x128xf32>,
    %c0_1 = arith.constant 0 : index
    %c0_2 = arith.constant 0 : index
    %2 = vector.load %arg1[%c0_1, %c0_2] : memref<128x13xf32, #tpu.memory_space<vmem>>, vector<128x13xf32>
    %c0_3 = arith.constant 0 : index
    %c0_4 = arith.constant 0 : index
    %3 = vector.load %arg5[%c0_3, %c0_4] : memref<128x128xf32, #tpu.memory_space<vmem>>, vector<128x13xf32>
    tpu.vector_store %arg5[%c0_3, %c0_4], %2 {strides = array<i32>} : memref<128x128xf32, #tpu.memory_space<vmem>>, vector<128x13xf32>,
    %c0_5 = arith.constant 0 : index
    %c0_6 = arith.constant 0 : index
    %4 = vector.load %arg5[%c0_5, %c0_6] : memref<128x128xf32, #tpu.memory_space<vmem>>, vector<128x128xf32>
    %5 = arith.truncf %4 : vector<128x128xf32> to vector<128x128xbf16>
    %c0_7 = arith.constant 0 : index
    %c0_8 = arith.constant 0 : index
    %c0_9 = arith.constant 0 : index
    %6 = vector.load %arg2[%c0_7, %c0_8, %c0_9] : memref<4x128x128xbf16, #tpu.memory_space<vmem>>, vector<1x128x128xbf16>
    %7 = vector.shape_cast %6 : vector<1x128x128xbf16> to vector<128x128xbf16>
    %cst_10 = arith.constant dense<0.000000e+00> : vector<128x128xf32>
    %8 = tpu.matmul %5, %7, %cst_10 {dimension_numbers = #tpu.dot_dimension_numbers<[1], [0], [0], [1], [0, 0, 1, 1], [], []>} : vector<128x128xbf16>, vector<128x128xbf16>, vector<128x128xf32> -> vector<128x128xf32>
    %c0_11 = arith.constant 0 : index
    %c0_12 = arith.constant 0 : index
    %c0_13 = arith.constant 0 : index
    %9 = vector.load %arg3[%c0_11, %c0_12, %c0_13] : memref<4x1x128xf32, #tpu.memory_space<vmem>>, vector<1x1x128xf32>
    %10 = vector.shape_cast %9 : vector<1x1x128xf32> to vector<1x128xf32>
    %11 = vector.broadcast %10 : vector<1x128xf32> to vector<128x128xf32>
    %12 = arith.addf %8, %11 : vector<128x128xf32>
    %cst_14 = arith.constant 0.000000e+00 : f32
    %13 = vector.broadcast %cst_14 : f32 to vector<128x128xf32>
    %14 = arith.maximumf %12, %13 : vector<128x128xf32>
    %15 = arith.truncf %14 : vector<128x128xf32> to vector<128x128xbf16>
    %c1 = arith.constant 1 : index
    %c0_15 = arith.constant 0 : index
    %c0_16 = arith.constant 0 : index
    %16 = vector.load %arg2[%c1, %c0_15, %c0_16] : memref<4x128x128xbf16, #tpu.memory_space<vmem>>, vector<1x128x128xbf16>
    %17 = vector.shape_cast %16 : vector<1x128x128xbf16> to vector<128x128xbf16>
    %cst_17 = arith.constant dense<0.000000e+00> : vector<128x128xf32>
    %18 = tpu.matmul %15, %17, %cst_17 {dimension_numbers = #tpu.dot_dimension_numbers<[1], [0], [0], [1], [0, 0, 1, 1], [], []>} : vector<128x128xbf16>, vector<128x128xbf16>, vector<128x128xf32> -> vector<128x128xf32>
    %c1_18 = arith.constant 1 : index
    %c0_19 = arith.constant 0 : index
    %c0_20 = arith.constant 0 : index
    %19 = vector.load %arg3[%c1_18, %c0_19, %c0_20] : memref<4x1x128xf32, #tpu.memory_space<vmem>>, vector<1x1x128xf32>
    %20 = vector.shape_cast %19 : vector<1x1x128xf32> to vector<1x128xf32>
    %21 = vector.broadcast %20 : vector<1x128xf32> to vector<128x128xf32>
    %22 = arith.addf %18, %21 : vector<128x128xf32>
    %cst_21 = arith.constant 0.000000e+00 : f32
    %23 = vector.broadcast %cst_21 : f32 to vector<128x128xf32>
    %24 = arith.maximumf %22, %23 : vector<128x128xf32>
    %25 = arith.truncf %24 : vector<128x128xf32> to vector<128x128xbf16>
    %c2 = arith.constant 2 : index
    %c0_22 = arith.constant 0 : index
    %c0_23 = arith.constant 0 : index
    %26 = vector.load %arg2[%c2, %c0_22, %c0_23] : memref<4x128x128xbf16, #tpu.memory_space<vmem>>, vector<1x128x128xbf16>
    %27 = vector.shape_cast %26 : vector<1x128x128xbf16> to vector<128x128xbf16>
    %cst_24 = arith.constant dense<0.000000e+00> : vector<128x128xf32>
    %28 = tpu.matmul %25, %27, %cst_24 {dimension_numbers = #tpu.dot_dimension_numbers<[1], [0], [0], [1], [0, 0, 1, 1], [], []>} : vector<128x128xbf16>, vector<128x128xbf16>, vector<128x128xf32> -> vector<128x128xf32>
    %c2_25 = arith.constant 2 : index
    %c0_26 = arith.constant 0 : index
    %c0_27 = arith.constant 0 : index
    %29 = vector.load %arg3[%c2_25, %c0_26, %c0_27] : memref<4x1x128xf32, #tpu.memory_space<vmem>>, vector<1x1x128xf32>
    %30 = vector.shape_cast %29 : vector<1x1x128xf32> to vector<1x128xf32>
    %31 = vector.broadcast %30 : vector<1x128xf32> to vector<128x128xf32>
    %32 = arith.addf %28, %31 : vector<128x128xf32>
    %cst_28 = arith.constant 0.000000e+00 : f32
    %33 = vector.broadcast %cst_28 : f32 to vector<128x128xf32>
    %34 = arith.maximumf %32, %33 : vector<128x128xf32>
    %35 = arith.truncf %34 : vector<128x128xf32> to vector<128x128xbf16>
    %c3 = arith.constant 3 : index
    %c0_29 = arith.constant 0 : index
    %c0_30 = arith.constant 0 : index
    %36 = vector.load %arg2[%c3, %c0_29, %c0_30] : memref<4x128x128xbf16, #tpu.memory_space<vmem>>, vector<1x128x128xbf16>
    %37 = vector.shape_cast %36 : vector<1x128x128xbf16> to vector<128x128xbf16>
    %cst_31 = arith.constant dense<0.000000e+00> : vector<128x128xf32>
    %38 = tpu.matmul %35, %37, %cst_31 {dimension_numbers = #tpu.dot_dimension_numbers<[1], [0], [0], [1], [0, 0, 1, 1], [], []>} : vector<128x128xbf16>, vector<128x128xbf16>, vector<128x128xf32> -> vector<128x128xf32>
    %c3_32 = arith.constant 3 : index
    %c0_33 = arith.constant 0 : index
    %c0_34 = arith.constant 0 : index
    %39 = vector.load %arg3[%c3_32, %c0_33, %c0_34] : memref<4x1x128xf32, #tpu.memory_space<vmem>>, vector<1x1x128xf32>
    %40 = vector.shape_cast %39 : vector<1x1x128xf32> to vector<1x128xf32>
    %41 = vector.broadcast %40 : vector<1x128xf32> to vector<128x128xf32>
    %42 = arith.addf %38, %41 : vector<128x128xf32>
    %c0_35 = arith.constant 0 : index
    %c0_36 = arith.constant 0 : index
    %43 = vector.load %arg4[%c0_35, %c0_36] : memref<128x128xf32, #tpu.memory_space<vmem>>, vector<128x128xf32>
    tpu.vector_store %arg4[%c0_35, %c0_36], %42 {strides = array<i32>} : memref<128x128xf32, #tpu.memory_space<vmem>>, vector<128x128xf32>,
    return
  }
  func.func @transform_0(%arg0: i32) -> (i32, i32) {
    %c0_i32 = arith.constant 0 : i32
    %c0_i32_0 = arith.constant 0 : i32
    return %arg0, %c0_i32 : i32, i32
  }
  func.func @transform_1(%arg0: i32) -> (i32, i32, i32) {
    %c0_i32 = arith.constant 0 : i32
    %c0_i32_0 = arith.constant 0 : i32
    %c0_i32_1 = arith.constant 0 : i32
    %c0_i32_2 = arith.constant 0 : i32
    return %c0_i32, %c0_i32_0, %c0_i32_1 : i32, i32, i32
  }
  func.func @transform_2(%arg0: i32) -> (i32, i32, i32) {
    %c0_i32 = arith.constant 0 : i32
    %c0_i32_0 = arith.constant 0 : i32
    %c0_i32_1 = arith.constant 0 : i32
    %c0_i32_2 = arith.constant 0 : i32
    return %c0_i32, %c0_i32_0, %c0_i32_1 : i32, i32, i32
  }
  func.func @transform_3(%arg0: i32) -> (i32, i32) {
    %c0_i32 = arith.constant 0 : i32
    %c0_i32_0 = arith.constant 0 : i32
    return %arg0, %c0_i32 : i32, i32
  }
}

</mosaic_0001>

<llo_original>
// kernel: _forward_impl.1
$region0: #{_forward_impl.1}
  #allocation0 [shape = 'u32[]', space=smem, size = 0x4, offset = 0x4, fixed_abs, tag = 'smem constant byte address 0x4 - core index']
  #allocation1 [shape = 'u32[144,128]{1,0:T(1,128)}', space=vmem, size = 0x12000, scoped, tag = 'internal scratch']
  #allocation2 [shape = 'f32[128,128]{1,0:T(8,128)}', space=vmem, size = 0x10000, scoped, tag = 'scratch operand']
  %s0 = inlined_call_operand.vmem [shape: f32[128,13], index: 0, kind: input, shape index: {}]
  %s1 = inlined_call_operand.hbm [shape: bf16[4,128,128], index: 1, kind: input, shape index: {}]
  %s2 = inlined_call_operand.vmem [shape: f32[4,1,128], index: 2, kind: input, shape index: {}]
  %s3 = inlined_call_operand.vmem [shape: f32[128,128], index: 3, kind: output, shape index: {}]
  %s4 = sld [smem:[#allocation0]]
  $region26: #{_forward_impl.1} parent=0
    _
  %s6 = ssub.s32 1, %s4
  %s7 = scalar_select 0, %s6, %s4
  $region1: #{_forward_impl.1} parent=0
    #allocation3 [shape = 'u8[131072]{0}', space=vmem, size = 0x20000, scoped, tag = 'input window, operand 1, single buffered']
    #allocation4 [shape = 's32[1]{0}', space=sflag, size = 0x4, scoped, tag = 'scoped memory for _forward_impl.1']
    %8 = vsyncpa [#allocation4], 0
    // Predicated region
    $region2: #{_forward_impl.1} parent=1 // pred_check
      _
    $region3: #{_forward_impl.1} parent=1 // pred_check_branch
      %10 = sbr.rel (0) target = $region5
    $region4: #{_forward_impl.1} parent=1 // pred_region
      _
    $region5: #{_forward_impl.1} parent=1 // pred_fallthru
      _
    // Predicated region
    $region6: #{_forward_impl.1} parent=1 // pred_check
      _
    $region7: #{_forward_impl.1} parent=1 // pred_check_branch
      %12 = sbr.rel (0) target = $region9
    $region8: #{_forward_impl.1} parent=1 // pred_region
      %s14 = ssub.s32 4096, 4096
      %15 = vsyncadd [#allocation4], %s14
      %s16 = sshll.u32 [#allocation3], 4
      %s17 = int_to_ptr.vmem [resolvable:$true] %s16
      %22 = dma.hbm_to_vmem [thread:$0]  %s1, 4096, %s17, [#allocation4], 64, 64, 4
    $region9: #{_forward_impl.1} parent=1 // pred_fallthru
      _
    // Predicated region
    $region10: #{_forward_impl.1} parent=1 // pred_check
      _
    $region11: #{_forward_impl.1} parent=1 // pred_check_branch
      %24 = sbr.rel (0) target = $region13
    $region12: #{_forward_impl.1} parent=1 // pred_region
      _
    $region13: #{_forward_impl.1} parent=1 // pred_fallthru
      _
    // Predicated region
    $region14: #{_forward_impl.1} parent=1 // pred_check
      _
    $region15: #{_forward_impl.1} parent=1 // pred_check_branch
      %26 = sbr.rel (0) target = $region17
    $region16: #{_forward_impl.1} parent=1 // pred_region
      %27 = dma.done [#allocation4], 4096
    $region17: #{_forward_impl.1} parent=1 // pred_fallthru
      _
    %29 = vst [vmem:[#allocation2] sm:$0xff] 0.0
    %30 = vst [vmem:[#allocation2 + $0x8] sm:$0xff] 0.0
    %31 = vst [vmem:[#allocation2 + $0x10] sm:$0xff] 0.0
    %32 = vst [vmem:[#allocation2 + $0x18] sm:$0xff] 0.0
    %33 = vst [vmem:[#allocation2 + $0x20] sm:$0xff] 0.0
    %34 = vst [vmem:[#allocation2 + $0x28] sm:$0xff] 0.0
    %35 = vst [vmem:[#allocation2 + $0x30] sm:$0xff] 0.0
    %36 = vst [vmem:[#allocation2 + $0x38] sm:$0xff] 0.0
    %37 = vst [vmem:[#allocation2 + $0x40] sm:$0xff] 0.0
    %38 = vst [vmem:[#allocation2 + $0x48] sm:$0xff] 0.0
    %39 = vst [vmem:[#allocation2 + $0x50] sm:$0xff] 0.0
    %40 = vst [vmem:[#allocation2 + $0x58] sm:$0xff] 0.0
    %41 = vst [vmem:[#allocation2 + $0x60] sm:$0xff] 0.0
    %42 = vst [vmem:[#allocation2 + $0x68] sm:$0xff] 0.0
    %43 = vst [vmem:[#allocation2 + $0x70] sm:$0xff] 0.0
    %44 = vst [vmem:[#allocation2 + $0x78] sm:$0xff] 0.0
    %v45 = vld [vmem:[%s0] sm:$0xff]
    %v46 = vld [vmem:[%s0 + $0x8] sm:$0xff]
    %v47 = vld [vmem:[%s0 + $0x10] sm:$0xff]
    %v48 = vld [vmem:[%s0 + $0x18] sm:$0xff]
    %v49 = vld [vmem:[%s0 + $0x20] sm:$0xff]
    %v50 = vld [vmem:[%s0 + $0x28] sm:$0xff]
    %v51 = vld [vmem:[%s0 + $0x30] sm:$0xff]
    %v52 = vld [vmem:[%s0 + $0x38] sm:$0xff]
    %v53 = vld [vmem:[%s0 + $0x40] sm:$0xff]
    %v54 = vld [vmem:[%s0 + $0x48] sm:$0xff]
    %v55 = vld [vmem:[%s0 + $0x50] sm:$0xff]
    %v56 = vld [vmem:[%s0 + $0x58] sm:$0xff]
    %v57 = vld [vmem:[%s0 + $0x60] sm:$0xff]
    %v58 = vld [vmem:[%s0 + $0x68] sm:$0xff]
    %v59 = vld [vmem:[%s0 + $0x70] sm:$0xff]
    %v60 = vld [vmem:[%s0 + $0x78] sm:$0xff]
    %vm61 = vcmask 105472
    %62 = vst.msk [vmem:[#allocation2] sm:$0xff] %vm61, %v45
    %63 = vst.msk [vmem:[#allocation2 + $0x8] sm:$0xff] %vm61, %v46
    %64 = vst.msk [vmem:[#allocation2 + $0x10] sm:$0xff] %vm61, %v47
    %65 = vst.msk [vmem:[#allocation2 + $0x18] sm:$0xff] %vm61, %v48
    %66 = vst.msk [vmem:[#allocation2 + $0x20] sm:$0xff] %vm61, %v49
    %67 = vst.msk [vmem:[#allocation2 + $0x28] sm:$0xff] %vm61, %v50
    %68 = vst.msk [vmem:[#allocation2 + $0x30] sm:$0xff] %vm61, %v51
    %69 = vst.msk [vmem:[#allocation2 + $0x38] sm:$0xff] %vm61, %v52
    %70 = vst.msk [vmem:[#allocation2 + $0x40] sm:$0xff] %vm61, %v53
    %71 = vst.msk [vmem:[#allocation2 + $0x48] sm:$0xff] %vm61, %v54
    %72 = vst.msk [vmem:[#allocation2 + $0x50] sm:$0xff] %vm61, %v55
    %73 = vst.msk [vmem:[#allocation2 + $0x58] sm:$0xff] %vm61, %v56
    %74 = vst.msk [vmem:[#allocation2 + $0x60] sm:$0xff] %vm61, %v57
    %75 = vst.msk [vmem:[#allocation2 + $0x68] sm:$0xff] %vm61, %v58
    %76 = vst.msk [vmem:[#allocation2 + $0x70] sm:$0xff] %vm61, %v59
    %77 = vst.msk [vmem:[#allocation2 + $0x78] sm:$0xff] %vm61, %v60
    %v78 = vld [vmem:[#allocation2] sm:$0xff]
    %v79 = vld [vmem:[#allocation2 + $0x8] sm:$0xff]
    %v80 = vld [vmem:[#allocation2 + $0x10] sm:$0xff]
    %v81 = vld [vmem:[#allocation2 + $0x18] sm:$0xff]
    %v82 = vld [vmem:[#allocation2 + $0x20] sm:$0xff]
    %v83 = vld [vmem:[#allocation2 + $0x28] sm:$0xff]
    %v84 = vld [vmem:[#allocation2 + $0x30] sm:$0xff]
    %v85 = vld [vmem:[#allocation2 + $0x38] sm:$0xff]
    %v86 = vld [vmem:[#allocation2 + $0x40] sm:$0xff]
    %v87 = vld [vmem:[#allocation2 + $0x48] sm:$0xff]
    %v88 = vld [vmem:[#allocation2 + $0x50] sm:$0xff]
    %v89 = vld [vmem:[#allocation2 + $0x58] sm:$0xff]
    %v90 = vld [vmem:[#allocation2 + $0x60] sm:$0xff]
    %v91 = vld [vmem:[#allocation2 + $0x68] sm:$0xff]
    %v92 = vld [vmem:[#allocation2 + $0x70] sm:$0xff]
    %v93 = vld [vmem:[#allocation2 + $0x78] sm:$0xff]
    %v94 = vpack.c.bf16 %v79, %v78
    %v95 = vpack.c.bf16 %v81, %v80
    %v96 = vpack.c.bf16 %v83, %v82
    %v97 = vpack.c.bf16 %v85, %v84
    %v98 = vpack.c.bf16 %v87, %v86
    %v99 = vpack.c.bf16 %v89, %v88
    %v100 = vpack.c.bf16 %v91, %v90
    %v101 = vpack.c.bf16 %v93, %v92
    %v102 = vld [vmem:[#allocation3] sm:$0xf]
    %v103 = vld [vmem:[#allocation3 + $0x4] sm:$0xf]
    %v104 = vld [vmem:[#allocation3 + $0x8] sm:$0xf]
    %v105 = vld [vmem:[#allocation3 + $0xc] sm:$0xf]
    %v106 = vld [vmem:[#allocation3 + $0x10] sm:$0xf]
    %v107 = vld [vmem:[#allocation3 + $0x14] sm:$0xf]
    %v108 = vld [vmem:[#allocation3 + $0x18] sm:$0xf]
    %v109 = vld [vmem:[#allocation3 + $0x1c] sm:$0xf]
    %v110 = vld [vmem:[#allocation3 + $0x20] sm:$0xf]
    %v111 = vld [vmem:[#allocation3 + $0x24] sm:$0xf]
    %v112 = vld [vmem:[#allocation3 + $0x28] sm:$0xf]
    %v113 = vld [vmem:[#allocation3 + $0x2c] sm:$0xf]
    %v114 = vld [vmem:[#allocation3 + $0x30] sm:$0xf]
    %v115 = vld [vmem:[#allocation3 + $0x34] sm:$0xf]
    %v116 = vld [vmem:[#allocation3 + $0x38] sm:$0xf]
    %v117 = vld [vmem:[#allocation3 + $0x3c] sm:$0xf]
    %v118 = vld [vmem:[%s2] sm:$0x1]
    %v120 = vlaneseq
    %v121 = vshrl.u32 %v120, 7
    %v122 = vsub.s32 0, %v121
    %v123 = vrot.slane %v118, %v122
    %v141 = vunpack.c.l.b16 %v102
    %v142 = vunpack.c.l.b16 %v103
    %v143 = vunpack.c.l.b16 %v104
    %v144 = vunpack.c.l.b16 %v105
    %v145 = vunpack.c.l.b16 %v106
    %v146 = vunpack.c.l.b16 %v107
    %v147 = vunpack.c.l.b16 %v108
    %v148 = vunpack.c.l.b16 %v109
    %v149 = vunpack.c.l.b16 %v110
    %v150 = vunpack.c.l.b16 %v111
    %v151 = vunpack.c.l.b16 %v112
    %v152 = vunpack.c.l.b16 %v113
    %v153 = vunpack.c.l.b16 %v114
    %v154 = vunpack.c.l.b16 %v115
    %v155 = vunpack.c.l.b16 %v116
    %v156 = vunpack.c.l.b16 %v117
    %v157 = vpack.c.b16 %v142, %v141
    %v158 = vpack.c.b16 %v144, %v143
    %v159 = vpack.c.b16 %v146, %v145
    %v160 = vpack.c.b16 %v148, %v147
    %v161 = vpack.c.b16 %v150, %v149
    %v162 = vpack.c.b16 %v152, %v151
    %v163 = vpack.c.b16 %v154, %v153
    %v164 = vpack.c.b16 %v156, %v155
    %173 = vmatprep.subr.bf16.mxu0 0
    %174 = vmatpush1.bf16.msra.mxu0 %v157
    %175 = vmatprep.subr.bf16.mxu0 0
    %176 = vmatpush1.bf16.msra.mxu0 %v158
    %177 = vmatprep.subr.bf16.mxu0 0
    %178 = vmatpush1.bf16.msra.mxu0 %v159
    %179 = vmatprep.subr.bf16.mxu0 0
    %180 = vmatpush1.bf16.msra.mxu0 %v160
    %181 = vmatprep.subr.bf16.mxu0 0
    %182 = vmatpush1.bf16.msra.mxu0 %v161
    %183 = vmatprep.subr.bf16.mxu0 0
    %184 = vmatpush1.bf16.msra.mxu0 %v162
    %185 = vmatprep.subr.bf16.mxu0 0
    %186 = vmatpush1.bf16.msra.mxu0 %v163
    %187 = vmatprep.subr.bf16.mxu0 0
    %188 = vmatpush1.bf16.msra.mxu0 %v164
    %189 = vmatprep.subr.bf16.mxu0 0
    %190 = vmatpush1.bf16.msra.mxu0 0
    %191 = vmatprep.subr.bf16.mxu0 0
    %192 = vmatpush1.bf16.msra.mxu0 0
    %193 = vmatprep.subr.bf16.mxu0 0
    %194 = vmatpush1.bf16.msra.mxu0 0
    %195 = vmatprep.subr.bf16.mxu0 0
    %196 = vmatpush1.bf16.msra.mxu0 0
    %197 = vmatprep.subr.bf16.mxu0 0
    %198 = vmatpush1.bf16.msra.mxu0 0
    %199 = vmatprep.subr.bf16.mxu0 0
    %200 = vmatpush1.bf16.msra.mxu0 0
    %201 = vmatprep.subr.bf16.mxu0 0
    %202 = vmatpush1.bf16.msra.mxu0 0
    %203 = vmatprep.subr.bf16.mxu0 0
    %204 = vmatpush1.bf16.msra.mxu0 0
    %205 = vmatprep.mubr.bf16.mxu0 0
    %206 = vmatmul.mubr.bf16.gmra.mrb[0].mxu0 %v94
    %v207 = vpop.f32.mrb[0].mxu0
    %v208 = vadd.f32 %v123, %v207
    %v209 = vpop.f32.mrb[0].mxu0
    %v210 = vpop.f32.mrb[0].mxu0
    %v211 = vadd.f32 %v123, %v210
    %v212 = vpop.f32.mrb[0].mxu0
    %213 = vmatprep.mubr.bf16.mxu0 0
    %214 = vmatmul.mubr.bf16.gmra.mrb[0].mxu0 %v95
    %v215 = vpop.f32.mrb[0].mxu0
    %v216 = vadd.f32 %v123, %v215
    %v217 = vpop.f32.mrb[0].mxu0
    %v218 = vpop.f32.mrb[0].mxu0
    %v219 = vadd.f32 %v123, %v218
    %v220 = vpop.f32.mrb[0].mxu0
    %221 = vmatprep.mubr.bf16.mxu0 0
    %222 = vmatmul.mubr.bf16.gmra.mrb[0].mxu0 %v96
    %v223 = vpop.f32.mrb[0].mxu0
    %v224 = vadd.f32 %v123, %v223
    %v225 = vpop.f32.mrb[0].mxu0
    %v226 = vpop.f32.mrb[0].mxu0
    %v227 = vadd.f32 %v123, %v226
    %v228 = vpop.f32.mrb[0].mxu0
    %229 = vmatprep.mubr.bf16.mxu0 0
    %230 = vmatmul.mubr.bf16.gmra.mrb[0].mxu0 %v97
    %v231 = vpop.f32.mrb[0].mxu0
    %v232 = vadd.f32 %v123, %v231
    %v233 = vpop.f32.mrb[0].mxu0
    %v234 = vpop.f32.mrb[0].mxu0
    %v235 = vadd.f32 %v123, %v234
    %v236 = vpop.f32.mrb[0].mxu0
    %237 = vmatprep.mubr.bf16.mxu0 0
    %238 = vmatmul.mubr.bf16.gmra.mrb[0].mxu0 %v98
    %v239 = vpop.f32.mrb[0].mxu0
    %v240 = vadd.f32 %v123, %v239
    %v241 = vpop.f32.mrb[0].mxu0
    %v242 = vpop.f32.mrb[0].mxu0
    %v243 = vadd.f32 %v123, %v242
    %v244 = vpop.f32.mrb[0].mxu0
    %245 = vmatprep.mubr.bf16.mxu0 0
    %246 = vmatmul.mubr.bf16.gmra.mrb[0].mxu0 %v99
    %v247 = vpop.f32.mrb[0].mxu0
    %v248 = vadd.f32 %v123, %v247
    %v249 = vpop.f32.mrb[0].mxu0
    %v250 = vpop.f32.mrb[0].mxu0
    %v251 = vadd.f32 %v123, %v250
    %v252 = vpop.f32.mrb[0].mxu0
    %253 = vmatprep.mubr.bf16.mxu0 0
    %254 = vmatmul.mubr.bf16.gmra.mrb[0].mxu0 %v100
    %v255 = vpop.f32.mrb[0].mxu0
    %v256 = vadd.f32 %v123, %v255
    %v257 = vpop.f32.mrb[0].mxu0
    %v258 = vpop.f32.mrb[0].mxu0
    %v259 = vadd.f32 %v123, %v258
    %v260 = vpop.f32.mrb[0].mxu0
    %261 = vmatprep.mubr.bf16.mxu0 0
    %262 = vmatmul.mubr.bf16.gmra.mrb[0].mxu0 %v101
    %v263 = vpop.f32.mrb[0].mxu0
    %v264 = vadd.f32 %v123, %v263
    %v265 = vpop.f32.mrb[0].mxu0
    %v266 = vpop.f32.mrb[0].mxu0
    %v267 = vadd.f32 %v123, %v266
    %v268 = vpop.f32.mrb[0].mxu0
    %269 = vdwg.mxu0
    %v270 = vmax.f32 %v208, 0.0
    %v271 = vmax.f32 %v211, 0.0
    %v272 = vmax.f32 %v216, 0.0
    %v273 = vmax.f32 %v219, 0.0
    %v274 = vmax.f32 %v224, 0.0
    %v275 = vmax.f32 %v227, 0.0
    %v276 = vmax.f32 %v232, 0.0
    %v277 = vmax.f32 %v235, 0.0
    %v278 = vmax.f32 %v240, 0.0
    %v279 = vmax.f32 %v243, 0.0
    %v280 = vmax.f32 %v248, 0.0
    %v281 = vmax.f32 %v251, 0.0
    %v282 = vmax.f32 %v256, 0.0
    %v283 = vmax.f32 %v259, 0.0
    %v284 = vmax.f32 %v264, 0.0
    %v285 = vmax.f32 %v267, 0.0
    %v286 = vpack.c.bf16 %v271, %v270
    %v287 = vpack.c.bf16 %v273, %v272
    %v288 = vpack.c.bf16 %v275, %v274
    %v289 = vpack.c.bf16 %v277, %v276
    %v290 = vpack.c.bf16 %v279, %v278
    %v291 = vpack.c.bf16 %v281, %v280
    %v292 = vpack.c.bf16 %v283, %v282
    %v293 = vpack.c.bf16 %v285, %v284
    %s294 = scalar_lea.vmem [#allocation3], 64
    %v295 = vld [vmem:[%s294] sm:$0xf]
    %v296 = vld [vmem:[%s294 + $0x4] sm:$0xf]
    %v297 = vld [vmem:[%s294 + $0x8] sm:$0xf]
    %v298 = vld [vmem:[%s294 + $0xc] sm:$0xf]
    %v299 = vld [vmem:[%s294 + $0x10] sm:$0xf]
    %v300 = vld [vmem:[%s294 + $0x14] sm:$0xf]
    %v301 = vld [vmem:[%s294 + $0x18] sm:$0xf]
    %v302 = vld [vmem:[%s294 + $0x1c] sm:$0xf]
    %v303 = vld [vmem:[%s294 + $0x20] sm:$0xf]
    %v304 = vld [vmem:[%s294 + $0x24] sm:$0xf]
    %v305 = vld [vmem:[%s294 + $0x28] sm:$0xf]
    %v306 = vld [vmem:[%s294 + $0x2c] sm:$0xf]
    %v307 = vld [vmem:[%s294 + $0x30] sm:$0xf]
    %v308 = vld [vmem:[%s294 + $0x34] sm:$0xf]
    %v309 = vld [vmem:[%s294 + $0x38] sm:$0xf]
    %v310 = vld [vmem:[%s294 + $0x3c] sm:$0xf]
    %s311 = scalar_lea.vmem %s2, 1
    %v312 = vld [vmem:[%s311] sm:$0x1]
    %v314 = vlaneseq
    %v315 = vshrl.u32 %v314, 7
    %v316 = vsub.s32 0, %v315
    %v317 = vrot.slane %v312, %v316
    %v335 = vunpack.c.l.b16 %v295
    %v336 = vunpack.c.l.b16 %v296
    %v337 = vunpack.c.l.b16 %v297
    %v338 = vunpack.c.l.b16 %v298
    %v339 = vunpack.c.l.b16 %v299
    %v340 = vunpack.c.l.b16 %v300
    %v341 = vunpack.c.l.b16 %v301
    %v342 = vunpack.c.l.b16 %v302
    %v343 = vunpack.c.l.b16 %v303
    %v344 = vunpack.c.l.b16 %v304
    %v345 = vunpack.c.l.b16 %v305
    %v346 = vunpack.c.l.b16 %v306
    %v347 = vunpack.c.l.b16 %v307
    %v348 = vunpack.c.l.b16 %v308
    %v349 = vunpack.c.l.b16 %v309
    %v350 = vunpack.c.l.b16 %v310
    %v351 = vpack.c.b16 %v336, %v335
    %v352 = vpack.c.b16 %v338, %v337
    %v353 = vpack.c.b16 %v340, %v339
    %v354 = vpack.c.b16 %v342, %v341
    %v355 = vpack.c.b16 %v344, %v343
    %v356 = vpack.c.b16 %v346, %v345
    %v357 = vpack.c.b16 %v348, %v347
    %v358 = vpack.c.b16 %v350, %v349
    %367 = vmatprep.subr.bf16.mxu0 0
    %368 = vmatpush1.bf16.msra.mxu0 %v351
    %369 = vmatprep.subr.bf16.mxu0 0
    %370 = vmatpush1.bf16.msra.mxu0 %v352
    %371 = vmatprep.subr.bf16.mxu0 0
    %372 = vmatpush1.bf16.msra.mxu0 %v353
    %373 = vmatprep.subr.bf16.mxu0 0
    %374 = vmatpush1.bf16.msra.mxu0 %v354
    %375 = vmatprep.subr.bf16.mxu0 0
    %376 = vmatpush1.bf16.msra.mxu0 %v355
    %377 = vmatprep.subr.bf16.mxu0 0
    %378 = vmatpush1.bf16.msra.mxu0 %v356
    %379 = vmatprep.subr.bf16.mxu0 0
    %380 = vmatpush1.bf16.msra.mxu0 %v357
    %381 = vmatprep.subr.bf16.mxu0 0
    %382 = vmatpush1.bf16.msra.mxu0 %v358
    %383 = vmatprep.subr.bf16.mxu0 0
    %384 = vmatpush1.bf16.msra.mxu0 0
    %385 = vmatprep.subr.bf16.mxu0 0
    %386 = vmatpush1.bf16.msra.mxu0 0
    %387 = vmatprep.subr.bf16.mxu0 0
    %388 = vmatpush1.bf16.msra.mxu0 0
    %389 = vmatprep.subr.bf16.mxu0 0
    %390 = vmatpush1.bf16.msra.mxu0 0
    %391 = vmatprep.subr.bf16.mxu0 0
    %392 = vmatpush1.bf16.msra.mxu0 0
    %393 = vmatprep.subr.bf16.mxu0 0
    %394 = vmatpush1.bf16.msra.mxu0 0
    %395 = vmatprep.subr.bf16.mxu0 0
    %396 = vmatpush1.bf16.msra.mxu0 0
    %397 = vmatprep.subr.bf16.mxu0 0
    %398 = vmatpush1.bf16.msra.mxu0 0
    %399 = vmatprep.mubr.bf16.mxu0 0
    %400 = vmatmul.mubr.bf16.gmra.mrb[0].mxu0 %v286
    %v401 = vpop.f32.mrb[0].mxu0
    %v402 = vadd.f32 %v317, %v401
    %v403 = vpop.f32.mrb[0].mxu0
    %v404 = vpop.f32.mrb[0].mxu0
    %v405 = vadd.f32 %v317, %v404
    %v406 = vpop.f32.mrb[0].mxu0
    %407 = vmatprep.mubr.bf16.mxu0 0
    %408 = vmatmul.mubr.bf16.gmra.mrb[0].mxu0 %v287
    %v409 = vpop.f32.mrb[0].mxu0
    %v410 = vadd.f32 %v317, %v409
    %v411 = vpop.f32.mrb[0].mxu0
    %v412 = vpop.f32.mrb[0].mxu0
    %v413 = vadd.f32 %v317, %v412
    %v414 = vpop.f32.mrb[0].mxu0
    %415 = vmatprep.mubr.bf16.mxu0 0
    %416 = vmatmul.mubr.bf16.gmra.mrb[0].mxu0 %v288
    %v417 = vpop.f32.mrb[0].mxu0
    %v418 = vadd.f32 %v317, %v417
    %v419 = vpop.f32.mrb[0].mxu0
    %v420 = vpop.f32.mrb[0].mxu0
    %v421 = vadd.f32 %v317, %v420
    %v422 = vpop.f32.mrb[0].mxu0
    %423 = vmatprep.mubr.bf16.mxu0 0
    %424 = vmatmul.mubr.bf16.gmra.mrb[0].mxu0 %v289
    %v425 = vpop.f32.mrb[0].mxu0
    %v426 = vadd.f32 %v317, %v425
    %v427 = vpop.f32.mrb[0].mxu0
    %v428 = vpop.f32.mrb[0].mxu0
    %v429 = vadd.f32 %v317, %v428
    %v430 = vpop.f32.mrb[0].mxu0
    %431 = vmatprep.mubr.bf16.mxu0 0
    %432 = vmatmul.mubr.bf16.gmra.mrb[0].mxu0 %v290
    %v433 = vpop.f32.mrb[0].mxu0
    %v434 = vadd.f32 %v317, %v433
    %v435 = vpop.f32.mrb[0].mxu0
    %v436 = vpop.f32.mrb[0].mxu0
    %v437 = vadd.f32 %v317, %v436
    %v438 = vpop.f32.mrb[0].mxu0
    %439 = vmatprep.mubr.bf16.mxu0 0
    %440 = vmatmul.mubr.bf16.gmra.mrb[0].mxu0 %v291
    %v441 = vpop.f32.mrb[0].mxu0
    %v442 = vadd.f32 %v317, %v441
    %v443 = vpop.f32.mrb[0].mxu0
    %v444 = vpop.f32.mrb[0].mxu0
    %v445 = vadd.f32 %v317, %v444
    %v446 = vpop.f32.mrb[0].mxu0
    %447 = vmatprep.mubr.bf16.mxu0 0
    %448 = vmatmul.mubr.bf16.gmra.mrb[0].mxu0 %v292
    %v449 = vpop.f32.mrb[0].mxu0
    %v450 = vadd.f32 %v317, %v449
    %v451 = vpop.f32.mrb[0].mxu0
    %v452 = vpop.f32.mrb[0].mxu0
    %v453 = vadd.f32 %v317, %v452
    %v454 = vpop.f32.mrb[0].mxu0
    %455 = vmatprep.mubr.bf16.mxu0 0
    %456 = vmatmul.mubr.bf16.gmra.mrb[0].mxu0 %v293
    %v457 = vpop.f32.mrb[0].mxu0
    %v458 = vadd.f32 %v317, %v457
    %v459 = vpop.f32.mrb[0].mxu0
    %v460 = vpop.f32.mrb[0].mxu0
    %v461 = vadd.f32 %v317, %v460
    %v462 = vpop.f32.mrb[0].mxu0
    %463 = vdwg.mxu0
    %v464 = vmax.f32 %v402, 0.0
    %v465 = vmax.f32 %v405, 0.0
    %v466 = vmax.f32 %v410, 0.0
    %v467 = vmax.f32 %v413, 0.0
    %v468 = vmax.f32 %v418, 0.0
    %v469 = vmax.f32 %v421, 0.0
    %v470 = vmax.f32 %v426, 0.0
    %v471 = vmax.f32 %v429, 0.0
    %v472 = vmax.f32 %v434, 0.0
    %v473 = vmax.f32 %v437, 0.0
    %v474 = vmax.f32 %v442, 0.0
    %v475 = vmax.f32 %v445, 0.0
    %v476 = vmax.f32 %v450, 0.0
    %v477 = vmax.f32 %v453, 0.0
    %v478 = vmax.f32 %v458, 0.0
    %v479 = vmax.f32 %v461, 0.0
    %v480 = vpack.c.bf16 %v465, %v464
    %v481 = vpack.c.bf16 %v467, %v466
    %v482 = vpack.c.bf16 %v469, %v468
    %v483 = vpack.c.bf16 %v471, %v470
    %v484 = vpack.c.bf16 %v473, %v472
    %v485 = vpack.c.bf16 %v475, %v474
    %v486 = vpack.c.bf16 %v477, %v476
    %v487 = vpack.c.bf16 %v479, %v478
    %s488 = scalar_lea.vmem [#allocation3], 128
    %v489 = vld [vmem:[%s488] sm:$0xf]
    %v490 = vld [vmem:[%s488 + $0x4] sm:$0xf]
    %v491 = vld [vmem:[%s488 + $0x8] sm:$0xf]
    %v492 = vld [vmem:[%s488 + $0xc] sm:$0xf]
    %v493 = vld [vmem:[%s488 + $0x10] sm:$0xf]
    %v494 = vld [vmem:[%s488 + $0x14] sm:$0xf]
    %v495 = vld [vmem:[%s488 + $0x18] sm:$0xf]
    %v496 = vld [vmem:[%s488 + $0x1c] sm:$0xf]
    %v497 = vld [vmem:[%s488 + $0x20] sm:$0xf]
    %v498 = vld [vmem:[%s488 + $0x24] sm:$0xf]
    %v499 = vld [vmem:[%s488 + $0x28] sm:$0xf]
    %v500 = vld [vmem:[%s488 + $0x2c] sm:$0xf]
    %v501 = vld [vmem:[%s488 + $0x30] sm:$0xf]
    %v502 = vld [vmem:[%s488 + $0x34] sm:$0xf]
    %v503 = vld [vmem:[%s488 + $0x38] sm:$0xf]
    %v504 = vld [vmem:[%s488 + $0x3c] sm:$0xf]
    %s505 = scalar_lea.vmem %s2, 2
    %v506 = vld [vmem:[%s505] sm:$0x1]
    %v508 = vlaneseq
    %v509 = vshrl.u32 %v508, 7
    %v510 = vsub.s32 0, %v509
    %v511 = vrot.slane %v506, %v510
    %v529 = vunpack.c.l.b16 %v489
    %v530 = vunpack.c.l.b16 %v490
    %v531 = vunpack.c.l.b16 %v491
    %v532 = vunpack.c.l.b16 %v492
    %v533 = vunpack.c.l.b16 %v493
    %v534 = vunpack.c.l.b16 %v494
    %v535 = vunpack.c.l.b16 %v495
    %v536 = vunpack.c.l.b16 %v496
    %v537 = vunpack.c.l.b16 %v497
    %v538 = vunpack.c.l.b16 %v498
    %v539 = vunpack.c.l.b16 %v499
    %v540 = vunpack.c.l.b16 %v500
    %v541 = vunpack.c.l.b16 %v501
    %v542 = vunpack.c.l.b16 %v502
    %v543 = vunpack.c.l.b16 %v503
    %v544 = vunpack.c.l.b16 %v504
    %v545 = vpack.c.b16 %v530, %v529
    %v546 = vpack.c.b16 %v532, %v531
    %v547 = vpack.c.b16 %v534, %v533
    %v548 = vpack.c.b16 %v536, %v535
    %v549 = vpack.c.b16 %v538, %v537
    %v550 = vpack.c.b16 %v540, %v539
    %v551 = vpack.c.b16 %v542, %v541
    %v552 = vpack.c.b16 %v544, %v543
    %561 = vmatprep.subr.bf16.mxu0 0
    %562 = vmatpush1.bf16.msra.mxu0 %v545
    %563 = vmatprep.subr.bf16.mxu0 0
    %564 = vmatpush1.bf16.msra.mxu0 %v546
    %565 = vmatprep.subr.bf16.mxu0 0
    %566 = vmatpush1.bf16.msra.mxu0 %v547
    %567 = vmatprep.subr.bf16.mxu0 0
    %568 = vmatpush1.bf16.msra.mxu0 %v548
    %569 = vmatprep.subr.bf16.mxu0 0
    %570 = vmatpush1.bf16.msra.mxu0 %v549
    %571 = vmatprep.subr.bf16.mxu0 0
    %572 = vmatpush1.bf16.msra.mxu0 %v550
    %573 = vmatprep.subr.bf16.mxu0 0
    %574 = vmatpush1.bf16.msra.mxu0 %v551
    %575 = vmatprep.subr.bf16.mxu0 0
    %576 = vmatpush1.bf16.msra.mxu0 %v552
    %577 = vmatprep.subr.bf16.mxu0 0
    %578 = vmatpush1.bf16.msra.mxu0 0
    %579 = vmatprep.subr.bf16.mxu0 0
    %580 = vmatpush1.bf16.msra.mxu0 0
    %581 = vmatprep.subr.bf16.mxu0 0
    %582 = vmatpush1.bf16.msra.mxu0 0
    %583 = vmatprep.subr.bf16.mxu0 0
    %584 = vmatpush1.bf16.msra.mxu0 0
    %585 = vmatprep.subr.bf16.mxu0 0
    %586 = vmatpush1.bf16.msra.mxu0 0
    %587 = vmatprep.subr.bf16.mxu0 0
    %588 = vmatpush1.bf16.msra.mxu0 0
    %589 = vmatprep.subr.bf16.mxu0 0
    %590 = vmatpush1.bf16.msra.mxu0 0
    %591 = vmatprep.subr.bf16.mxu0 0
    %592 = vmatpush1.bf16.msra.mxu0 0
    %593 = vmatprep.mubr.bf16.mxu0 0
    %594 = vmatmul.mubr.bf16.gmra.mrb[0].mxu0 %v480
    %v595 = vpop.f32.mrb[0].mxu0
    %v596 = vadd.f32 %v511, %v595
    %v597 = vpop.f32.mrb[0].mxu0
    %v598 = vpop.f32.mrb[0].mxu0
    %v599 = vadd.f32 %v511, %v598
    %v600 = vpop.f32.mrb[0].mxu0
    %601 = vmatprep.mubr.bf16.mxu0 0
    %602 = vmatmul.mubr.bf16.gmra.mrb[0].mxu0 %v481
    %v603 = vpop.f32.mrb[0].mxu0
    %v604 = vadd.f32 %v511, %v603
    %v605 = vpop.f32.mrb[0].mxu0
    %v606 = vpop.f32.mrb[0].mxu0
    %v607 = vadd.f32 %v511, %v606
    %v608 = vpop.f32.mrb[0].mxu0
    %609 = vmatprep.mubr.bf16.mxu0 0
    %610 = vmatmul.mubr.bf16.gmra.mrb[0].mxu0 %v482
    %v611 = vpop.f32.mrb[0].mxu0
    %v612 = vadd.f32 %v511, %v611
    %v613 = vpop.f32.mrb[0].mxu0
    %v614 = vpop.f32.mrb[0].mxu0
    %v615 = vadd.f32 %v511, %v614
    %v616 = vpop.f32.mrb[0].mxu0
    %617 = vmatprep.mubr.bf16.mxu0 0
    %618 = vmatmul.mubr.bf16.gmra.mrb[0].mxu0 %v483
    %v619 = vpop.f32.mrb[0].mxu0
    %v620 = vadd.f32 %v511, %v619
    %v621 = vpop.f32.mrb[0].mxu0
    %v622 = vpop.f32.mrb[0].mxu0
    %v623 = vadd.f32 %v511, %v622
    %v624 = vpop.f32.mrb[0].mxu0
    %625 = vmatprep.mubr.bf16.mxu0 0
    %626 = vmatmul.mubr.bf16.gmra.mrb[0].mxu0 %v484
    %v627 = vpop.f32.mrb[0].mxu0
    %v628 = vadd.f32 %v511, %v627
    %v629 = vpop.f32.mrb[0].mxu0
    %v630 = vpop.f32.mrb[0].mxu0
    %v631 = vadd.f32 %v511, %v630
    %v632 = vpop.f32.mrb[0].mxu0
    %633 = vmatprep.mubr.bf16.mxu0 0
    %634 = vmatmul.mubr.bf16.gmra.mrb[0].mxu0 %v485
    %v635 = vpop.f32.mrb[0].mxu0
    %v636 = vadd.f32 %v511, %v635
    %v637 = vpop.f32.mrb[0].mxu0
    %v638 = vpop.f32.mrb[0].mxu0
    %v639 = vadd.f32 %v511, %v638
    %v640 = vpop.f32.mrb[0].mxu0
    %641 = vmatprep.mubr.bf16.mxu0 0
    %642 = vmatmul.mubr.bf16.gmra.mrb[0].mxu0 %v486
    %v643 = vpop.f32.mrb[0].mxu0
    %v644 = vadd.f32 %v511, %v643
    %v645 = vpop.f32.mrb[0].mxu0
    %v646 = vpop.f32.mrb[0].mxu0
    %v647 = vadd.f32 %v511, %v646
    %v648 = vpop.f32.mrb[0].mxu0
    %649 = vmatprep.mubr.bf16.mxu0 0
    %650 = vmatmul.mubr.bf16.gmra.mrb[0].mxu0 %v487
    %v651 = vpop.f32.mrb[0].mxu0
    %v652 = vadd.f32 %v511, %v651
    %v653 = vpop.f32.mrb[0].mxu0
    %v654 = vpop.f32.mrb[0].mxu0
    %v655 = vadd.f32 %v511, %v654
    %v656 = vpop.f32.mrb[0].mxu0
    %657 = vdwg.mxu0
    %v658 = vmax.f32 %v596, 0.0
    %v659 = vmax.f32 %v599, 0.0
    %v660 = vmax.f32 %v604, 0.0
    %v661 = vmax.f32 %v607, 0.0
    %v662 = vmax.f32 %v612, 0.0
    %v663 = vmax.f32 %v615, 0.0
    %v664 = vmax.f32 %v620, 0.0
    %v665 = vmax.f32 %v623, 0.0
    %v666 = vmax.f32 %v628, 0.0
    %v667 = vmax.f32 %v631, 0.0
    %v668 = vmax.f32 %v636, 0.0
    %v669 = vmax.f32 %v639, 0.0
    %v670 = vmax.f32 %v644, 0.0
    %v671 = vmax.f32 %v647, 0.0
    %v672 = vmax.f32 %v652, 0.0
    %v673 = vmax.f32 %v655, 0.0
    %v674 = vpack.c.bf16 %v659, %v658
    %v675 = vpack.c.bf16 %v661, %v660
    %v676 = vpack.c.bf16 %v663, %v662
    %v677 = vpack.c.bf16 %v665, %v664
    %v678 = vpack.c.bf16 %v667, %v666
    %v679 = vpack.c.bf16 %v669, %v668
    %v680 = vpack.c.bf16 %v671, %v670
    %v681 = vpack.c.bf16 %v673, %v672
    %s682 = scalar_lea.vmem [#allocation3], 192
    %v683 = vld [vmem:[%s682] sm:$0xf]
    %v684 = vld [vmem:[%s682 + $0x4] sm:$0xf]
    %v685 = vld [vmem:[%s682 + $0x8] sm:$0xf]
    %v686 = vld [vmem:[%s682 + $0xc] sm:$0xf]
    %v687 = vld [vmem:[%s682 + $0x10] sm:$0xf]
    %v688 = vld [vmem:[%s682 + $0x14] sm:$0xf]
    %v689 = vld [vmem:[%s682 + $0x18] sm:$0xf]
    %v690 = vld [vmem:[%s682 + $0x1c] sm:$0xf]
    %v691 = vld [vmem:[%s682 + $0x20] sm:$0xf]
    %v692 = vld [vmem:[%s682 + $0x24] sm:$0xf]
    %v693 = vld [vmem:[%s682 + $0x28] sm:$0xf]
    %v694 = vld [vmem:[%s682 + $0x2c] sm:$0xf]
    %v695 = vld [vmem:[%s682 + $0x30] sm:$0xf]
    %v696 = vld [vmem:[%s682 + $0x34] sm:$0xf]
    %v697 = vld [vmem:[%s682 + $0x38] sm:$0xf]
    %v698 = vld [vmem:[%s682 + $0x3c] sm:$0xf]
    %s699 = scalar_lea.vmem %s2, 3
    %v700 = vld [vmem:[%s699] sm:$0x1]
    %v702 = vlaneseq
    %v703 = vshrl.u32 %v702, 7
    %v704 = vsub.s32 0, %v703
    %v705 = vrot.slane %v700, %v704
    %v723 = vunpack.c.l.b16 %v683
    %v724 = vunpack.c.l.b16 %v684
    %v725 = vunpack.c.l.b16 %v685
    %v726 = vunpack.c.l.b16 %v686
    %v727 = vunpack.c.l.b16 %v687
    %v728 = vunpack.c.l.b16 %v688
    %v729 = vunpack.c.l.b16 %v689
    %v730 = vunpack.c.l.b16 %v690
    %v731 = vunpack.c.l.b16 %v691
    %v732 = vunpack.c.l.b16 %v692
    %v733 = vunpack.c.l.b16 %v693
    %v734 = vunpack.c.l.b16 %v694
    %v735 = vunpack.c.l.b16 %v695
    %v736 = vunpack.c.l.b16 %v696
    %v737 = vunpack.c.l.b16 %v697
    %v738 = vunpack.c.l.b16 %v698
    %v739 = vpack.c.b16 %v724, %v723
    %v740 = vpack.c.b16 %v726, %v725
    %v741 = vpack.c.b16 %v728, %v727
    %v742 = vpack.c.b16 %v730, %v729
    %v743 = vpack.c.b16 %v732, %v731
    %v744 = vpack.c.b16 %v734, %v733
    %v745 = vpack.c.b16 %v736, %v735
    %v746 = vpack.c.b16 %v738, %v737
    %755 = vmatprep.subr.bf16.mxu0 0
    %756 = vmatpush1.bf16.msra.mxu0 %v739
    %757 = vmatprep.subr.bf16.mxu0 0
    %758 = vmatpush1.bf16.msra.mxu0 %v740
    %759 = vmatprep.subr.bf16.mxu0 0
    %760 = vmatpush1.bf16.msra.mxu0 %v741
    %761 = vmatprep.subr.bf16.mxu0 0
    %762 = vmatpush1.bf16.msra.mxu0 %v742
    %763 = vmatprep.subr.bf16.mxu0 0
    %764 = vmatpush1.bf16.msra.mxu0 %v743
    %765 = vmatprep.subr.bf16.mxu0 0
    %766 = vmatpush1.bf16.msra.mxu0 %v744
    %767 = vmatprep.subr.bf16.mxu0 0
    %768 = vmatpush1.bf16.msra.mxu0 %v745
    %769 = vmatprep.subr.bf16.mxu0 0
    %770 = vmatpush1.bf16.msra.mxu0 %v746
    %771 = vmatprep.subr.bf16.mxu0 0
    %772 = vmatpush1.bf16.msra.mxu0 0
    %773 = vmatprep.subr.bf16.mxu0 0
    %774 = vmatpush1.bf16.msra.mxu0 0
    %775 = vmatprep.subr.bf16.mxu0 0
    %776 = vmatpush1.bf16.msra.mxu0 0
    %777 = vmatprep.subr.bf16.mxu0 0
    %778 = vmatpush1.bf16.msra.mxu0 0
    %779 = vmatprep.subr.bf16.mxu0 0
    %780 = vmatpush1.bf16.msra.mxu0 0
    %781 = vmatprep.subr.bf16.mxu0 0
    %782 = vmatpush1.bf16.msra.mxu0 0
    %783 = vmatprep.subr.bf16.mxu0 0
    %784 = vmatpush1.bf16.msra.mxu0 0
    %785 = vmatprep.subr.bf16.mxu0 0
    %786 = vmatpush1.bf16.msra.mxu0 0
    %787 = vmatprep.mubr.bf16.mxu0 0
    %788 = vmatmul.mubr.bf16.gmra.mrb[0].mxu0 %v674
    %v789 = vpop.f32.mrb[0].mxu0
    %v790 = vadd.f32 %v705, %v789
    %v791 = vpop.f32.mrb[0].mxu0
    %v792 = vpop.f32.mrb[0].mxu0
    %v793 = vadd.f32 %v705, %v792
    %v794 = vpop.f32.mrb[0].mxu0
    %795 = vmatprep.mubr.bf16.mxu0 0
    %796 = vmatmul.mubr.bf16.gmra.mrb[0].mxu0 %v675
    %v797 = vpop.f32.mrb[0].mxu0
    %v798 = vadd.f32 %v705, %v797
    %v799 = vpop.f32.mrb[0].mxu0
    %v800 = vpop.f32.mrb[0].mxu0
    %v801 = vadd.f32 %v705, %v800
    %v802 = vpop.f32.mrb[0].mxu0
    %803 = vmatprep.mubr.bf16.mxu0 0
    %804 = vmatmul.mubr.bf16.gmra.mrb[0].mxu0 %v676
    %v805 = vpop.f32.mrb[0].mxu0
    %v806 = vadd.f32 %v705, %v805
    %v807 = vpop.f32.mrb[0].mxu0
    %v808 = vpop.f32.mrb[0].mxu0
    %v809 = vadd.f32 %v705, %v808
    %v810 = vpop.f32.mrb[0].mxu0
    %811 = vmatprep.mubr.bf16.mxu0 0
    %812 = vmatmul.mubr.bf16.gmra.mrb[0].mxu0 %v677
    %v813 = vpop.f32.mrb[0].mxu0
    %v814 = vadd.f32 %v705, %v813
    %v815 = vpop.f32.mrb[0].mxu0
    %v816 = vpop.f32.mrb[0].mxu0
    %v817 = vadd.f32 %v705, %v816
    %v818 = vpop.f32.mrb[0].mxu0
    %819 = vmatprep.mubr.bf16.mxu0 0
    %820 = vmatmul.mubr.bf16.gmra.mrb[0].mxu0 %v678
    %v821 = vpop.f32.mrb[0].mxu0
    %v822 = vadd.f32 %v705, %v821
    %v823 = vpop.f32.mrb[0].mxu0
    %v824 = vpop.f32.mrb[0].mxu0
    %v825 = vadd.f32 %v705, %v824
    %v826 = vpop.f32.mrb[0].mxu0
    %827 = vmatprep.mubr.bf16.mxu0 0
    %828 = vmatmul.mubr.bf16.gmra.mrb[0].mxu0 %v679
    %v829 = vpop.f32.mrb[0].mxu0
    %v830 = vadd.f32 %v705, %v829
    %v831 = vpop.f32.mrb[0].mxu0
    %v832 = vpop.f32.mrb[0].mxu0
    %v833 = vadd.f32 %v705, %v832
    %v834 = vpop.f32.mrb[0].mxu0
    %835 = vmatprep.mubr.bf16.mxu0 0
    %836 = vmatmul.mubr.bf16.gmra.mrb[0].mxu0 %v680
    %v837 = vpop.f32.mrb[0].mxu0
    %v838 = vadd.f32 %v705, %v837
    %v839 = vpop.f32.mrb[0].mxu0
    %v840 = vpop.f32.mrb[0].mxu0
    %v841 = vadd.f32 %v705, %v840
    %v842 = vpop.f32.mrb[0].mxu0
    %843 = vmatprep.mubr.bf16.mxu0 0
    %844 = vmatmul.mubr.bf16.gmra.mrb[0].mxu0 %v681
    %v845 = vpop.f32.mrb[0].mxu0
    %v846 = vadd.f32 %v705, %v845
    %v847 = vpop.f32.mrb[0].mxu0
    %v848 = vpop.f32.mrb[0].mxu0
    %v849 = vadd.f32 %v705, %v848
    %v850 = vpop.f32.mrb[0].mxu0
    %851 = vdwg.mxu0
    %852 = vst [vmem:[%s3] sm:$0xff] %v790
    %853 = vst [vmem:[%s3 + $0x8] sm:$0xff] %v793
    %854 = vst [vmem:[%s3 + $0x10] sm:$0xff] %v798
    %855 = vst [vmem:[%s3 + $0x18] sm:$0xff] %v801
    %856 = vst [vmem:[%s3 + $0x20] sm:$0xff] %v806
    %857 = vst [vmem:[%s3 + $0x28] sm:$0xff] %v809
    %858 = vst [vmem:[%s3 + $0x30] sm:$0xff] %v814
    %859 = vst [vmem:[%s3 + $0x38] sm:$0xff] %v817
    %860 = vst [vmem:[%s3 + $0x40] sm:$0xff] %v822
    %861 = vst [vmem:[%s3 + $0x48] sm:$0xff] %v825
    %862 = vst [vmem:[%s3 + $0x50] sm:$0xff] %v830
    %863 = vst [vmem:[%s3 + $0x58] sm:$0xff] %v833
    %864 = vst [vmem:[%s3 + $0x60] sm:$0xff] %v838
    %865 = vst [vmem:[%s3 + $0x68] sm:$0xff] %v841
    %866 = vst [vmem:[%s3 + $0x70] sm:$0xff] %v846
    %867 = vst [vmem:[%s3 + $0x78] sm:$0xff] %v849
    // Predicated region
    $region18: #{_forward_impl.1} parent=1 // pred_check
      _
    $region19: #{_forward_impl.1} parent=1 // pred_check_branch
      %869 = sbr.rel (0) target = $region21
    $region20: #{_forward_impl.1} parent=1 // pred_region
      _
    $region21: #{_forward_impl.1} parent=1 // pred_fallthru
      _
    // Predicated region
    $region22: #{_forward_impl.1} parent=1 // pred_check
      _
    $region23: #{_forward_impl.1} parent=1 // pred_check_branch
      %871 = sbr.rel (0) target = $region25
    $region24: #{_forward_impl.1} parent=1 // pred_region
      _
    $region25: #{_forward_impl.1} parent=1 // pred_fallthru
      _
    %872 = vsyncpa [#allocation4], 1

</llo_original>
